<compile_context>
chip_gen: v6e
topology: v6e:2x2x1
jax: 0.10.0
libtpu: 0.0.40
codegen_flags: <defaults>
</compile_context>

<pallas_src>
import jax
import jax.numpy as jnp
from jax.experimental import pallas as pl
from jax.experimental.pallas import tpu as pltpu

# TODO(synk): Astrocyte / Microglia / DopamineSystem / AcetylcholineSystem class
# bodies are not provided in the reference source; the glia `.process` calls are
# omitted (equivalent to use_glia=False). Neuromodulation scalar factors ARE
# implemented since their math is fully visible in CorticalLayer.forward.
# Dropout is eval-mode identity.


# ----------------------------------------------------------------------------
# activations
# ----------------------------------------------------------------------------
def _activation(layer_type, z):
    if layer_type == "L1":
        return jnp.tanh(z)
    if layer_type in ("L2", "L3"):
        return jnp.where(z > 0, z, 0.1 * z)      # LeakyReLU(0.1)
    if layer_type == "L4":
        return jnp.maximum(z, 0.0)               # ReLU
    if layer_type == "L5":
        return jnp.tanh(z)
    if layer_type == "L6":
        return jax.nn.sigmoid(z)
    raise ValueError(f"unknown layer type: {layer_type}")


# ----------------------------------------------------------------------------
# kernels
# ----------------------------------------------------------------------------
def _make_kernel(layer_type: str, apply_mod: bool, recurrent: bool, k_tiled: bool):
    """Fused GEMM (+ recurrent GEMM) + bias + neuromod + activation kernel."""

    def epilogue(z, mod):
        if apply_mod:
            z = z * mod                          # neuromod scalar from SMEM
        z = _activation(layer_type, z)
        # Dropout: eval-mode identity.
        if layer_type in ("L1", "L5"):
            z = jnp.tanh(z)
        return z

    if not k_tiled:
        # ---- fast path: whole K strip in one grid step, no accumulator ----
        if recurrent:
            def kernel(mod_ref, x_ref, s_ref, w_ref, wr_ref, b_ref, o_ref):
                z = jnp.dot(x_ref[...], w_ref[...],
                            preferred_element_type=jnp.float32)
                z = z + jnp.dot(s_ref[...], wr_ref[...],
                                preferred_element_type=jnp.float32)
                z = z + b_ref[...]
                o_ref[...] = epilogue(z, mod_ref[0, 0]).astype(o_ref.dtype)
        else:
            def kernel(mod_ref, x_ref, w_ref, b_ref, o_ref):
                z = jnp.dot(x_ref[...], w_ref[...],
                            preferred_element_type=jnp.float32) + b_ref[...]
                o_ref[...] = epilogue(z, mod_ref[0, 0]).astype(o_ref.dtype)
        return kernel

    # ---- K-tiled path: f32 VMEM accumulator, K innermost ("arbitrary") ----
    if recurrent:
        def kernel(mod_ref, x_ref, s_ref, w_ref, wr_ref, b_ref, o_ref, acc_ref):
            kk = pl.program_id(2)

            @pl.when(kk == 0)
            def _init():
                acc_ref[...] = jnp.zeros_like(acc_ref)

            acc_ref[...] += jnp.dot(x_ref[...], w_ref[...],
                                    preferred_element_type=jnp.float32)

            @pl.when(kk == pl.num_programs(2) - 1)
            def _finalize():
                z = acc_ref[...] + jnp.dot(s_ref[...], wr_ref[...],
                                           preferred_element_type=jnp.float32)
                z = z + b_ref[...]
                o_ref[...] = epilogue(z, mod_ref[0, 0]).astype(o_ref.dtype)
    else:
        def kernel(mod_ref, x_ref, w_ref, b_ref, o_ref, acc_ref):
            kk = pl.program_id(2)

            @pl.when(kk == 0)
            def _init():
                acc_ref[...] = jnp.zeros_like(acc_ref)

            acc_ref[...] += jnp.dot(x_ref[...], w_ref[...],
                                    preferred_element_type=jnp.float32)

            @pl.when(kk == pl.num_programs(2) - 1)
            def _finalize():
                z = acc_ref[...] + b_ref[...]
                o_ref[...] = epilogue(z, mod_ref[0, 0]).astype(o_ref.dtype)
    return kernel


# ----------------------------------------------------------------------------
# padding / tiling helpers
# ----------------------------------------------------------------------------
def _round_up(n, m):
    return -(-n // m) * m


def _largest_tile(total, cap, quantum=128):
    """Largest multiple-of-`quantum` divisor of `total` that is <= cap."""
    best = quantum
    t = quantum
    cap = min(cap, total)
    while t <= cap:
        if total % t == 0:
            best = t
        t += quantum
    return best


def _pad_cast(a, rows, cols, dtype):
    r, c = a.shape
    if (r, c) == (rows, cols) and a.dtype == dtype:
        return a
    buf = jnp.zeros((rows, cols), dtype)
    return buf.at[:r, :c].set(a.astype(dtype))


# ----------------------------------------------------------------------------
# one-time parameter preparation (transpose / pad / cast)
# ----------------------------------------------------------------------------
def prepare_cortical_params(params, compute_dtype=jnp.bfloat16):
    """Call ONCE per layer (not per forward).

    - transposes weights to (K, N) so the kernel computes x @ W^T directly,
    - zero-pads K / N to multiples of 128 (no over-padding),
    - pre-sums the two biases for the recurrent case,
    - casts matmul operands to bf16 (bias stays f32; f32 accumulation in-kernel).
    """
    dout, din = params["w"].shape
    n_pad = _round_up(dout, 128)
    k1_pad = _round_up(din, 128)

    def _pad_w(w_t, k, k_pad):
        wp = jnp.zeros((k_pad, n_pad), compute_dtype)
        return wp.at[:k, :dout].set(w_t.astype(compute_dtype))

    def _pad_b(b):
        bp = jnp.zeros((1, n_pad), jnp.float32)
        return bp.at[0, :dout].set(b.astype(jnp.float32))

    prep = {
        "din": din, "dout": dout, "n_pad": n_pad, "k1_pad": k1_pad,
        "compute_dtype": compute_dtype,
        "recurrent": "wr" in params,
        "w": _pad_w(params["w"].T, din, k1_pad),
        "b": _pad_b(params["b"]),
    }
    if prep["recurrent"]:
        prep["wr"] = _pad_w(params["wr"].T, dout, n_pad)
        prep["b_sum"] = _pad_b(params["b"] + params["br"])
    return prep


# ----------------------------------------------------------------------------
# forward
# ----------------------------------------------------------------------------
def cortical_layer_forward(prepared, x, state=None, context=None,
                           layer_type="L5", use_neuromodulation=True,
                           out_dtype=None, k_tile_cap=None,
                           vmem_budget_bytes=40 * 1024 * 1024):
    """Fused Pallas forward. Returns (output, new_state) with output == new_state.

    out_dtype: override output dtype (e.g. bf16 when chaining layers).
    k_tile_cap: optional cap (multiple of 128) forcing the K-tiled path (testing
                / very large input dims).
    """
    m, din = x.shape
    assert din == prepared["din"]
    dout, n_pad, k1_pad = prepared["dout"], prepared["n_pad"], prepared["k1_pad"]
    cdt = prepared["compute_dtype"]
    out_dtype = x.dtype if out_dtype is None else out_dtype
    out_isz = jnp.dtype(out_dtype).itemsize
    cdt_isz = jnp.dtype(cdt).itemsize

    use_rec = prepared["recurrent"] and (state is not None)

    # --- M tiling: whole padded batch in one tile when it fits (<=1024 rows) ---
    m_pad = _round_up(m, 16)                      # bf16 sublane packing
    if m_pad <= 1024:
        tm = m_pad
    else:
        m_pad = _round_up(m, 512)
        tm = 512

    # --- N tiling: pad to 128 multiple; largest 128-multiple divisor <= 512 ---
    tn = _largest_tile(n_pad, 512)

    # --- v7x: guarantee >=2 blocks on a parallel axis (2 TensorCores) ---------
    if (m_pad // tm) * (n_pad // tn) < 2:
        if n_pad // 128 >= 2:
            tn = _largest_tile(n_pad, n_pad // 2)      # split N: no extra W traffic
        elif m_pad >= 32 and m_pad % 32 == 0:
            tm = m_pad // 2                            # split M as a fallback
        # else: problem is tiny; a single core is fine.

    # --- K tiling on the main GEMM only (recurrent strip stays resident) ------
    fixed = (2 * tm * tn * out_isz        # double-buffered output tile
             + 2 * tn * 4                 # bias
             + tm * tn * 4)               # f32 accumulator (worst case)
    if use_rec:
        fixed += 2 * (tm * n_pad + n_pad * tn) * cdt_isz   # state + Wr resident
    cap = (vmem_budget_bytes - fixed) // (4 * (tm + tn) * cdt_isz // 2)
    cap = max((cap // 128) * 128, 128)
    if k_tile_cap is not None:
        cap = min(cap, k_tile_cap)
    if cap >= k1_pad:
        tk, k_tiled = k1_pad, False                  # fast path: one K step
    else:
        tk, k_tiled = _largest_tile(k1_pad, cap), True

    # --- activation-side pad / cast (skipped when already in padded layout) ---
    x_p = _pad_cast(x, m_pad, k1_pad, cdt)
    s_p = _pad_cast(state, m_pad, n_pad, cdt) if use_rec else None

    # --- neuromodulation scalar (0.5 + level) ----------------------------------
    apply_mod = (use_neuromodulation and context is not None
                 and layer_type in ("L1", "L2", "L3", "L4", "L5"))
    ctx = context or {}
    level = (ctx.get("dopamine", 0.5) if layer_type in ("L2", "L3", "L5")
             else ctx.get("acetylcholine", 0.5))
    mod = (jnp.asarray(level, jnp.float32) + 0.5).reshape(1, 1)

    bias = prepared["b_sum"] if use_rec else prepared["b"]
    w = prepared["w"]

    kernel = _make_kernel(layer_type, apply_mod, use_rec, k_tiled)

    # --- grid / specs ----------------------------------------------------------
    if not k_tiled:
        grid = (m_pad // tm, n_pad // tn)
        semantics = ("parallel", "parallel")
        in_specs = [
            pl.BlockSpec((1, 1), lambda i, j: (0, 0), memory_space=pltpu.SMEM),
            pl.BlockSpec((tm, k1_pad), lambda i, j: (i, 0)),
        ]
        args = [mod, x_p]
        if use_rec:
            in_specs.append(pl.BlockSpec((tm, n_pad), lambda i, j: (i, 0)))
            args.append(s_p)
        in_specs.append(pl.BlockSpec((k1_pad, tn), lambda i, j: (0, j)))
        args.append(w)
        if use_rec:
            in_specs.append(pl.BlockSpec((n_pad, tn), lambda i, j: (0, j)))
            args.append(prepared["wr"])
        in_specs.append(pl.BlockSpec((1, tn), lambda i, j: (0, j)))
        args.append(bias)
        out_spec = pl.BlockSpec((tm, tn), lambda i, j: (i, j))
        scratch = []
    else:
        grid = (m_pad // tm, n_pad // tn, k1_pad // tk)
        semantics = ("parallel", "parallel", "arbitrary")
        in_specs = [
            pl.BlockSpec((1, 1), lambda i, j, kk: (0, 0), memory_space=pltpu.SMEM),
            pl.BlockSpec((tm, tk), lambda i, j, kk: (i, kk)),
        ]
        args = [mod, x_p]
        if use_rec:
            in_specs.append(pl.BlockSpec((tm, n_pad), lambda i, j, kk: (i, 0)))
            args.append(s_p)
        in_specs.append(pl.BlockSpec((tk, tn), lambda i, j, kk: (kk, j)))
        args.append(w)
        if use_rec:
            in_specs.append(pl.BlockSpec((n_pad, tn), lambda i, j, kk: (0, j)))
            args.append(prepared["wr"])
        in_specs.append(pl.BlockSpec((1, tn), lambda i, j, kk: (0, j)))
        args.append(bias)
        out_spec = pl.BlockSpec((tm, tn), lambda i, j, kk: (i, j))
        scratch = [pltpu.VMEM((tm, tn), jnp.float32)]

    n_trans = {"L1": 2, "L5": 2, "L6": 1}.get(layer_type, 0)
    flops = 2 * m * din * dout + (2 * m * dout * dout if use_rec else 0)
    bytes_accessed = (x_p.size * cdt_isz + w.size * cdt_isz + bias.size * 4
                      + m_pad * n_pad * out_isz
                      + ((s_p.size + prepared["wr"].size) * cdt_isz if use_rec else 0))
    cost = pl.CostEstimate(flops=flops, transcendentals=m * dout * n_trans,
                           bytes_accessed=bytes_accessed)

    out_p = pl.pallas_call(
        kernel,
        out_shape=jax.ShapeDtypeStruct((m_pad, n_pad), out_dtype),
        grid_spec=pltpu.PrefetchScalarGridSpec(
            num_scalar_prefetch=0,
            grid=grid,
            in_specs=in_specs,
            out_specs=out_spec,
            scratch_shapes=scratch,
        ),
        compiler_params=pltpu.CompilerParams(
            dimension_semantics=semantics,
            vmem_limit_bytes=48 * 1024 * 1024,   # safe on v7x (64 MiB physical)
        ),
        cost_estimate=cost,
    )(*args)

    out = out_p if (m_pad == m and n_pad == dout) else out_p[:m, :dout]
    return out, out


# ----------------------------------------------------------------------------
# pure-JAX reference (eval mode), optionally with the same bf16 operand cast
# ----------------------------------------------------------------------------
def _reference_forward(params, x, state, context, layer_type, use_neuromod,
                       compute_dtype=jnp.float32):
    cdt = compute_dtype
    out = jnp.dot(x.astype(cdt), params["w"].T.astype(cdt),
                  preferred_element_type=jnp.float32) + params["b"]
    if "wr" in params and state is not None:
        out = out + jnp.dot(state.astype(cdt), params["wr"].T.astype(cdt),
                            preferred_element_type=jnp.float32) + params["br"]
    if use_neuromod and context is not None:
        if layer_type in ("L2", "L3", "L5"):
            out = out * (0.5 + context.get("dopamine", 0.5))
        if layer_type in ("L1", "L4"):
            out = out * (0.5 + context.get("acetylcholine", 0.5))
    out = _activation(layer_type, out)
    if layer_type in ("L1", "L5"):
        out = jnp.tanh(out)
    return out


def _init_params(key, input_dim, output_dim, recurrent):
    """Deterministic init matching nn.Linear's U(-1/sqrt(fan_in), 1/sqrt(fan_in))."""
    ks = jax.random.split(key, 4)
    lim = 1.0 / jnp.sqrt(jnp.float32(input_dim))
    p = {
        "w": jax.random.uniform(ks[0], (output_dim, input_dim), jnp.float32, -lim, lim),
        "b": jax.random.uniform(ks[1], (output_dim,), jnp.float32, -lim, lim),
    }
    if recurrent:
        lim_r = 1.0 / jnp.sqrt(jnp.float32(output_dim))
        p["wr"] = jax.random.uniform(ks[2], (output_dim, output_dim), jnp.float32,
                                     -lim_r, lim_r)
        p["br"] = jax.random.uniform(ks[3], (output_dim,), jnp.float32, -lim_r, lim_r)
    return p


if __name__ == "__main__":
    key = jax.random.PRNGKey(0)
    k_x, k_s, k_p1, k_p2, k_p3, k_x2, k_s2 = jax.random.split(key, 7)

    context = {"dopamine": 0.7, "acetylcholine": 0.3}

    # Deliberately non-aligned small shapes to exercise the lane-dense padding.
    batch, input_dim, output_dim = 6, 48, 40
    x = jax.random.normal(k_x, (batch, input_dim), jnp.float32)
    state = jax.random.normal(k_s, (batch, output_dim), jnp.float32)

    # ---- L5: recurrent (separate state/Wr inputs, single-step fast path) ----
    p5 = _init_params(k_p1, input_dim, output_dim, recurrent=True)
    prep5 = prepare_cortical_params(p5)           # one-time weight prep
    out5, st5 = cortical_layer_forward(prep5, x, state=state, context=context,
                                       layer_type="L5", use_neuromodulation=True)
    jax.block_until_ready(out5)
    ref5_bf = _reference_forward(p5, x, state, context, "L5", True,
                                 compute_dtype=jnp.bfloat16)
    ref5_f32 = _reference_forward(p5, x, state, context, "L5", True)
    assert out5.shape == (batch, output_dim)
    assert jnp.allclose(out5, ref5_bf, atol=2e-3, rtol=2e-3), "L5 mismatch (bf16 ref)"
    assert jnp.allclose(out5, ref5_f32, atol=5e-2, rtol=5e-2), "L5 mismatch (f32 ref)"
    assert jnp.allclose(st5, out5), "new_state must equal output"

    # ---- L4: non-recurrent (single GEMM) + ReLU + acetylcholine ----
    p4 = _init_params(k_p2, input_dim, output_dim, recurrent=False)
    prep4 = prepare_cortical_params(p4)
    out4, _ = cortical_layer_forward(prep4, x, state=None, context=context,
                                     layer_type="L4", use_neuromodulation=True)
    jax.block_until_ready(out4)
    ref4_bf = _reference_forward(p4, x, None, context, "L4", True,
                                 compute_dtype=jnp.bfloat16)
    assert jnp.allclose(out4, ref4_bf, atol=2e-3, rtol=2e-3), "L4 mismatch (bf16 ref)"

    # ---- L3: recurrent, larger non-aligned dims; exercise both the single-step
    #      path and the K-tiled accumulator path (forced via k_tile_cap), and the
    #      >=2-block N split used for v7x's two TensorCores. ----
    b3, d3_in, d3_out = 12, 200, 150
    x3 = jax.random.normal(k_x2, (b3, d3_in), jnp.float32)
    s3 = jax.random.normal(k_s2, (b3, d3_out), jnp.float32)
    p3 = _init_params(k_p3, d3_in, d3_out, recurrent=True)
    prep3 = prepare_cortical_params(p3)
    out3_fast, _ = cortical_layer_forward(prep3, x3, state=s3, context=context,
                                          layer_type="L3", use_neuromodulation=True)
    out3_tiled, _ = cortical_layer_forward(prep3, x3, state=s3, context=context,
                                           layer_type="L3", use_neuromodulation=True,
                                           k_tile_cap=128)
    jax.block_until_ready((out3_fast, out3_tiled))
    ref3_bf = _reference_forward(p3, x3, s3, context, "L3", True,
                                 compute_dtype=jnp.bfloat16)
    assert jnp.allclose(out3_fast, ref3_bf, atol=5e-3, rtol=5e-3), "L3 mismatch (fast)"
    assert jnp.allclose(out3_tiled, ref3_bf, atol=5e-3, rtol=5e-3), "L3 mismatch (tiled)"
    assert jnp.allclose(out3_fast, out3_tiled, atol=1e-5, rtol=1e-5), \
        "fast vs K-tiled path disagree"

    # ---- L1: non-recurrent, tanh + ACh + extra tanh, bf16 output for chaining ----
    out1, _ = cortical_layer_forward(prep4, x, state=None, context=context,
                                     layer_type="L1", use_neuromodulation=True,
                                     out_dtype=jnp.bfloat16)
    jax.block_until_ready(out1)
    ref1_bf = _reference_forward(p4, x, None, context, "L1", True,
                                 compute_dtype=jnp.bfloat16)
    assert out1.dtype == jnp.bfloat16
    assert jnp.allclose(out1.astype(jnp.float32), ref1_bf, atol=1e-2, rtol=1e-2), \
        "L1 mismatch (bf16 out)"

    print("KERNEL_OK")
</pallas_src>

<mosaic_0001>
module attributes {stable_mosaic.version = 11 : i64} {
  func.func @kernel(%arg0: i32, %arg1: i32, %arg2: memref<1x1xf32, #tpu.memory_space<smem>>, %arg3: memref<16x128xbf16, #tpu.memory_space<vmem>>, %arg4: memref<16x128xbf16, #tpu.memory_space<vmem>>, %arg5: memref<128x128xbf16, #tpu.memory_space<vmem>>, %arg6: memref<128x128xbf16, #tpu.memory_space<vmem>>, %arg7: memref<1x128xf32, #tpu.memory_space<vmem>>, %arg8: memref<16x128xf32, #tpu.memory_space<vmem>>) attributes {dimension_semantics = [#tpu.dimension_semantics<parallel>, #tpu.dimension_semantics<parallel>], iteration_bounds = array<i64: 1, 1>, scalar_prefetch = 0 : i64, scratch_operands = 0 : i64, tpu.core_type = #tpu.core_type<tc>, window_params = [{transform_indices = @transform_0, window_bounds = array<i64: 1, 1>}, {transform_indices = @transform_1, window_bounds = array<i64: 16, 128>}, {transform_indices = @transform_2, window_bounds = array<i64: 16, 128>}, {transform_indices = @transform_3, window_bounds = array<i64: 128, 128>}, {transform_indices = @transform_4, window_bounds = array<i64: 128, 128>}, {transform_indices = @transform_5, window_bounds = array<i64: 1, 128>}, {transform_indices = @transform_6, window_bounds = array<i64: 16, 128>}]} {
    %c0 = arith.constant 0 : index
    %c0_0 = arith.constant 0 : index
    %0 = vector.load %arg3[%c0, %c0_0] : memref<16x128xbf16, #tpu.memory_space<vmem>>, vector<16x128xbf16>
    %c0_1 = arith.constant 0 : index
    %c0_2 = arith.constant 0 : index
    %1 = vector.load %arg5[%c0_1, %c0_2] : memref<128x128xbf16, #tpu.memory_space<vmem>>, vector<128x128xbf16>
    %cst = arith.constant dense<0.000000e+00> : vector<16x128xf32>
    %2 = tpu.matmul %0, %1, %cst {dimension_numbers = #tpu.dot_dimension_numbers<[1], [0], [0], [1], [0, 0, 1, 1], [], []>} : vector<16x128xbf16>, vector<128x128xbf16>, vector<16x128xf32> -> vector<16x128xf32>
    %c0_3 = arith.constant 0 : index
    %c0_4 = arith.constant 0 : index
    %3 = vector.load %arg4[%c0_3, %c0_4] : memref<16x128xbf16, #tpu.memory_space<vmem>>, vector<16x128xbf16>
    %c0_5 = arith.constant 0 : index
    %c0_6 = arith.constant 0 : index
    %4 = vector.load %arg6[%c0_5, %c0_6] : memref<128x128xbf16, #tpu.memory_space<vmem>>, vector<128x128xbf16>
    %cst_7 = arith.constant dense<0.000000e+00> : vector<16x128xf32>
    %5 = tpu.matmul %3, %4, %cst_7 {dimension_numbers = #tpu.dot_dimension_numbers<[1], [0], [0], [1], [0, 0, 1, 1], [], []>} : vector<16x128xbf16>, vector<128x128xbf16>, vector<16x128xf32> -> vector<16x128xf32>
    %6 = arith.addf %2, %5 : vector<16x128xf32>
    %c0_8 = arith.constant 0 : index
    %c0_9 = arith.constant 0 : index
    %7 = vector.load %arg7[%c0_8, %c0_9] : memref<1x128xf32, #tpu.memory_space<vmem>>, vector<1x128xf32>
    %8 = vector.broadcast %7 : vector<1x128xf32> to vector<16x128xf32>
    %9 = arith.addf %6, %8 : vector<16x128xf32>
    %c0_10 = arith.constant 0 : index
    %c0_11 = arith.constant 0 : index
    %10 = memref.load %arg2[%c0_10, %c0_11] : memref<1x1xf32, #tpu.memory_space<smem>>
    %11 = vector.broadcast %10 : f32 to vector<16x128xf32>
    %12 = arith.mulf %9, %11 : vector<16x128xf32>
    %13 = math.tanh %12 : vector<16x128xf32>
    %14 = math.tanh %13 : vector<16x128xf32>
    %c0_12 = arith.constant 0 : index
    %c0_13 = arith.constant 0 : index
    %15 = vector.load %arg8[%c0_12, %c0_13] : memref<16x128xf32, #tpu.memory_space<vmem>>, vector<16x128xf32>
    tpu.vector_store %arg8[%c0_12, %c0_13], %14 {strides = array<i32>} : memref<16x128xf32, #tpu.memory_space<vmem>>, vector<16x128xf32>,
    return
  }
  func.func @transform_0(%arg0: i32, %arg1: i32) -> (i32, i32) {
    %c0_i32 = arith.constant 0 : i32
    %c0_i32_0 = arith.constant 0 : i32
    %c0_i32_1 = arith.constant 0 : i32
    return %c0_i32, %c0_i32_0 : i32, i32
  }
  func.func @transform_1(%arg0: i32, %arg1: i32) -> (i32, i32) {
    %c0_i32 = arith.constant 0 : i32
    %c0_i32_0 = arith.constant 0 : i32
    return %arg0, %c0_i32 : i32, i32
  }
  func.func @transform_2(%arg0: i32, %arg1: i32) -> (i32, i32) {
    %c0_i32 = arith.constant 0 : i32
    %c0_i32_0 = arith.constant 0 : i32
    return %arg0, %c0_i32 : i32, i32
  }
  func.func @transform_3(%arg0: i32, %arg1: i32) -> (i32, i32) {
    %c0_i32 = arith.constant 0 : i32
    %c0_i32_0 = arith.constant 0 : i32
    return %c0_i32, %arg1 : i32, i32
  }
  func.func @transform_4(%arg0: i32, %arg1: i32) -> (i32, i32) {
    %c0_i32 = arith.constant 0 : i32
    %c0_i32_0 = arith.constant 0 : i32
    return %c0_i32, %arg1 : i32, i32
  }
  func.func @transform_5(%arg0: i32, %arg1: i32) -> (i32, i32) {
    %c0_i32 = arith.constant 0 : i32
    %c0_i32_0 = arith.constant 0 : i32
    return %c0_i32, %arg1 : i32, i32
  }
  func.func @transform_6(%arg0: i32, %arg1: i32) -> (i32, i32) {
    %c0_i32 = arith.constant 0 : i32
    return %arg0, %arg1 : i32, i32
  }
}

</mosaic_0001>

<llo_original>
// kernel: tpu_custom_call.1
$region0: #{tpu_custom_call.1}
  #allocation0 [shape = 'u32[]', space=smem, size = 0x4, offset = 0x4, fixed_abs, tag = 'smem constant byte address 0x4 - core index']
  #allocation1 [shape = 'u32[144,128]{1,0:T(1,128)}', space=vmem, size = 0x12000, scoped, tag = 'internal scratch']
  #allocation2 [shape = 'f32[1,1]{1,0:T(1,128)S(6)}', space=smem, size = 0x200, scoped, tag = 'scoped memory for tpu_custom_call.1']
  %s0 = inlined_call_operand.<no memory space> [shape: f32[1,1], index: 0, kind: input, shape index: {}]
  %s1 = inlined_call_operand.hbm [shape: bf16[16,128], index: 1, kind: input, shape index: {}]
  %s2 = inlined_call_operand.hbm [shape: bf16[16,128], index: 2, kind: input, shape index: {}]
  %s3 = inlined_call_operand.hbm [shape: bf16[128,128], index: 3, kind: input, shape index: {}]
  %s4 = inlined_call_operand.hbm [shape: bf16[128,128], index: 4, kind: input, shape index: {}]
  %s5 = inlined_call_operand.vmem [shape: f32[1,128], index: 5, kind: input, shape index: {}]
  %s6 = inlined_call_operand.hbm [shape: f32[16,128], index: 6, kind: output, shape index: {}]
  %s7 = sld [smem:[#allocation0]]
  $region50: #{tpu_custom_call.1} parent=0
    _
  %s9 = ssub.s32 1, %s7
  %s10 = scalar_select 0, %s9, %s7
  %11 = sst [smem:[#allocation2]] %s0
  $region1: #{tpu_custom_call.1} parent=0
    #allocation3 [shape = 'u8[4096]{0}', space=vmem, size = 0x1000, scoped, tag = 'input window, operand 1, single buffered']
    #allocation4 [shape = 's32[1]{0}', space=sflag, size = 0x4, scoped, tag = 'scoped memory for tpu_custom_call.1']
    #allocation5 [shape = 's32[1]{0}', space=sflag, size = 0x4, scoped, tag = 'scoped memory for tpu_custom_call.1']
    #allocation6 [shape = 'u8[4096]{0}', space=vmem, size = 0x1000, scoped, tag = 'input window, operand 2, single buffered']
    #allocation7 [shape = 's32[1]{0}', space=sflag, size = 0x4, scoped, tag = 'scoped memory for tpu_custom_call.1']
    #allocation8 [shape = 'u8[32768]{0}', space=vmem, size = 0x8000, scoped, tag = 'input window, operand 3, single buffered']
    #allocation9 [shape = 'u8[32768]{0}', space=vmem, size = 0x8000, scoped, tag = 'input window, operand 4, single buffered']
    #allocation10 [shape = 's32[1]{0}', space=sflag, size = 0x4, scoped, tag = 'scoped memory for tpu_custom_call.1']
    #allocation11 [shape = 'u8[8192]{0}', space=vmem, size = 0x2000, scoped, tag = 'output window, operand 0, single buffered']
    %12 = vsyncpa [#allocation4], 0
    %13 = vsyncpa [#allocation7], 0
    %14 = vsyncpa [#allocation10], 0
    %15 = vsyncpa [#allocation5], 0
    // Predicated region
    $region2: #{tpu_custom_call.1} parent=1 // pred_check
      _
    $region3: #{tpu_custom_call.1} parent=1 // pred_check_branch
      %17 = sbr.rel (0) target = $region5
    $region4: #{tpu_custom_call.1} parent=1 // pred_region
      _
    $region5: #{tpu_custom_call.1} parent=1 // pred_fallthru
      _
    // Predicated region
    $region6: #{tpu_custom_call.1} parent=1 // pred_check
      _
    $region7: #{tpu_custom_call.1} parent=1 // pred_check_branch
      %19 = sbr.rel (0) target = $region9
    $region8: #{tpu_custom_call.1} parent=1 // pred_region
      %s21 = ssub.s32 128, 128
      %22 = vsyncadd [#allocation4], %s21
      %s23 = sshll.u32 [#allocation3], 4
      %s24 = int_to_ptr.vmem [resolvable:$true] %s23
      %29 = dma.hbm_to_vmem [thread:$0]  %s1, 128, %s24, [#allocation4], 64, 64, 4
    $region9: #{tpu_custom_call.1} parent=1 // pred_fallthru
      _
    // Predicated region
    $region10: #{tpu_custom_call.1} parent=1 // pred_check
      _
    $region11: #{tpu_custom_call.1} parent=1 // pred_check_branch
      %31 = sbr.rel (0) target = $region13
    $region12: #{tpu_custom_call.1} parent=1 // pred_region
      %s33 = ssub.s32 128, 128
      %34 = vsyncadd [#allocation7], %s33
      %s35 = sshll.u32 [#allocation6], 4
      %s36 = int_to_ptr.vmem [resolvable:$true] %s35
      %41 = dma.hbm_to_vmem [thread:$0]  %s2, 128, %s36, [#allocation7], 64, 64, 4
    $region13: #{tpu_custom_call.1} parent=1 // pred_fallthru
      _
    // Predicated region
    $region14: #{tpu_custom_call.1} parent=1 // pred_check
      _
    $region15: #{tpu_custom_call.1} parent=1 // pred_check_branch
      %43 = sbr.rel (0) target = $region17
    $region16: #{tpu_custom_call.1} parent=1 // pred_region
      %s45 = ssub.s32 1024, 1024
      %46 = vsyncadd [#allocation7], %s45
      %s47 = sshll.u32 [#allocation8], 4
      %s48 = int_to_ptr.vmem [resolvable:$true] %s47
      %53 = dma.hbm_to_vmem [thread:$0]  %s3, 1024, %s48, [#allocation7], 64, 64, 4
    $region17: #{tpu_custom_call.1} parent=1 // pred_fallthru
      _
    // Predicated region
    $region18: #{tpu_custom_call.1} parent=1 // pred_check
      _
    $region19: #{tpu_custom_call.1} parent=1 // pred_check_branch
      %55 = sbr.rel (0) target = $region21
    $region20: #{tpu_custom_call.1} parent=1 // pred_region
      %s57 = ssub.s32 1024, 1024
      %58 = vsyncadd [#allocation10], %s57
      %s59 = sshll.u32 [#allocation9], 4
      %s60 = int_to_ptr.vmem [resolvable:$true] %s59
      %65 = dma.hbm_to_vmem [thread:$0]  %s4, 1024, %s60, [#allocation10], 64, 64, 4
    $region21: #{tpu_custom_call.1} parent=1 // pred_fallthru
      _
    // Predicated region
    $region22: #{tpu_custom_call.1} parent=1 // pred_check
      _
    $region23: #{tpu_custom_call.1} parent=1 // pred_check_branch
      %67 = sbr.rel (0) target = $region25
    $region24: #{tpu_custom_call.1} parent=1 // pred_region
      _
    $region25: #{tpu_custom_call.1} parent=1 // pred_fallthru
      _
    // Predicated region
    $region26: #{tpu_custom_call.1} parent=1 // pred_check
      _
    $region27: #{tpu_custom_call.1} parent=1 // pred_check_branch
      %69 = sbr.rel (0) target = $region29
    $region28: #{tpu_custom_call.1} parent=1 // pred_region
      %70 = dma.done [#allocation4], 128
    $region29: #{tpu_custom_call.1} parent=1 // pred_fallthru
      _
    // Predicated region
    $region30: #{tpu_custom_call.1} parent=1 // pred_check
      _
    $region31: #{tpu_custom_call.1} parent=1 // pred_check_branch
      %72 = sbr.rel (0) target = $region33
    $region32: #{tpu_custom_call.1} parent=1 // pred_region
      %73 = dma.done [#allocation7], 128
    $region33: #{tpu_custom_call.1} parent=1 // pred_fallthru
      _
    // Predicated region
    $region34: #{tpu_custom_call.1} parent=1 // pred_check
      _
    $region35: #{tpu_custom_call.1} parent=1 // pred_check_branch
      %75 = sbr.rel (0) target = $region37
    $region36: #{tpu_custom_call.1} parent=1 // pred_region
      %76 = dma.done [#allocation7], 1024
    $region37: #{tpu_custom_call.1} parent=1 // pred_fallthru
      _
    // Predicated region
    $region38: #{tpu_custom_call.1} parent=1 // pred_check
      _
    $region39: #{tpu_custom_call.1} parent=1 // pred_check_branch
      %78 = sbr.rel (0) target = $region41
    $region40: #{tpu_custom_call.1} parent=1 // pred_region
      %79 = dma.done [#allocation10], 1024
    $region41: #{tpu_custom_call.1} parent=1 // pred_fallthru
      _
    %v81 = vld [vmem:[#allocation3] sm:$0xf]
    %v82 = vld [vmem:[#allocation3 + $0x4] sm:$0xf]
    %v83 = vld [vmem:[#allocation8] sm:$0xf]
    %v84 = vld [vmem:[#allocation8 + $0x4] sm:$0xf]
    %v85 = vld [vmem:[#allocation8 + $0x8] sm:$0xf]
    %v86 = vld [vmem:[#allocation8 + $0xc] sm:$0xf]
    %v87 = vld [vmem:[#allocation8 + $0x10] sm:$0xf]
    %v88 = vld [vmem:[#allocation8 + $0x14] sm:$0xf]
    %v89 = vld [vmem:[#allocation8 + $0x18] sm:$0xf]
    %v90 = vld [vmem:[#allocation8 + $0x1c] sm:$0xf]
    %v91 = vld [vmem:[#allocation8 + $0x20] sm:$0xf]
    %v92 = vld [vmem:[#allocation8 + $0x24] sm:$0xf]
    %v93 = vld [vmem:[#allocation8 + $0x28] sm:$0xf]
    %v94 = vld [vmem:[#allocation8 + $0x2c] sm:$0xf]
    %v95 = vld [vmem:[#allocation8 + $0x30] sm:$0xf]
    %v96 = vld [vmem:[#allocation8 + $0x34] sm:$0xf]
    %v97 = vld [vmem:[#allocation8 + $0x38] sm:$0xf]
    %v98 = vld [vmem:[#allocation8 + $0x3c] sm:$0xf]
    %v99 = vld [vmem:[#allocation6] sm:$0xf]
    %v100 = vld [vmem:[#allocation6 + $0x4] sm:$0xf]
    %v101 = vld [vmem:[#allocation9] sm:$0xf]
    %v102 = vld [vmem:[#allocation9 + $0x4] sm:$0xf]
    %v103 = vld [vmem:[#allocation9 + $0x8] sm:$0xf]
    %v104 = vld [vmem:[#allocation9 + $0xc] sm:$0xf]
    %v105 = vld [vmem:[#allocation9 + $0x10] sm:$0xf]
    %v106 = vld [vmem:[#allocation9 + $0x14] sm:$0xf]
    %v107 = vld [vmem:[#allocation9 + $0x18] sm:$0xf]
    %v108 = vld [vmem:[#allocation9 + $0x1c] sm:$0xf]
    %v109 = vld [vmem:[#allocation9 + $0x20] sm:$0xf]
    %v110 = vld [vmem:[#allocation9 + $0x24] sm:$0xf]
    %v111 = vld [vmem:[#allocation9 + $0x28] sm:$0xf]
    %v112 = vld [vmem:[#allocation9 + $0x2c] sm:$0xf]
    %v113 = vld [vmem:[#allocation9 + $0x30] sm:$0xf]
    %v114 = vld [vmem:[#allocation9 + $0x34] sm:$0xf]
    %v115 = vld [vmem:[#allocation9 + $0x38] sm:$0xf]
    %v116 = vld [vmem:[#allocation9 + $0x3c] sm:$0xf]
    %v119 = vunpack.c.l.b16 %v99
    %v120 = vunpack.c.l.b16 %v100
    %v121 = vpack.c.b16 %v120, %v119
    %v139 = vunpack.c.l.b16 %v101
    %v140 = vunpack.c.l.b16 %v102
    %v141 = vunpack.c.l.b16 %v103
    %v142 = vunpack.c.l.b16 %v104
    %v143 = vunpack.c.l.b16 %v105
    %v144 = vunpack.c.l.b16 %v106
    %v145 = vunpack.c.l.b16 %v107
    %v146 = vunpack.c.l.b16 %v108
    %v147 = vunpack.c.l.b16 %v109
    %v148 = vunpack.c.l.b16 %v110
    %v149 = vunpack.c.l.b16 %v111
    %v150 = vunpack.c.l.b16 %v112
    %v151 = vunpack.c.l.b16 %v113
    %v152 = vunpack.c.l.b16 %v114
    %v153 = vunpack.c.l.b16 %v115
    %v154 = vunpack.c.l.b16 %v116
    %v155 = vpack.c.b16 %v140, %v139
    %v156 = vpack.c.b16 %v142, %v141
    %v157 = vpack.c.b16 %v144, %v143
    %v158 = vpack.c.b16 %v146, %v145
    %v159 = vpack.c.b16 %v148, %v147
    %v160 = vpack.c.b16 %v150, %v149
    %v161 = vpack.c.b16 %v152, %v151
    %v162 = vpack.c.b16 %v154, %v153
    %171 = vmatprep.subr.bf16.mxu0 0
    %172 = vmatpush1.bf16.msra.mxu0 %v162
    %173 = vmatprep.subr.bf16.mxu0 0
    %174 = vmatpush1.bf16.msra.mxu0 %v161
    %175 = vmatprep.subr.bf16.mxu0 0
    %176 = vmatpush1.bf16.msra.mxu0 %v160
    %177 = vmatprep.subr.bf16.mxu0 0
    %178 = vmatpush1.bf16.msra.mxu0 %v159
    %179 = vmatprep.subr.bf16.mxu0 0
    %180 = vmatpush1.bf16.msra.mxu0 %v158
    %181 = vmatprep.subr.bf16.mxu0 0
    %182 = vmatpush1.bf16.msra.mxu0 %v157
    %183 = vmatprep.subr.bf16.mxu0 0
    %184 = vmatpush1.bf16.msra.mxu0 %v156
    %185 = vmatprep.subr.bf16.mxu0 0
    %186 = vmatpush1.bf16.msra.mxu0 %v155
    %187 = vmatprep.subr.bf16.mxu0 0
    %188 = vmatpush2.bf16.msra.mxu0 0
    %189 = vmatprep.subr.bf16.mxu0 0
    %190 = vmatpush2.bf16.msra.mxu0 0
    %191 = vmatprep.subr.bf16.mxu0 0
    %192 = vmatpush2.bf16.msra.mxu0 0
    %193 = vmatprep.subr.bf16.mxu0 0
    %194 = vmatpush2.bf16.msra.mxu0 0
    %195 = vmatprep.subr.bf16.mxu0 0
    %196 = vmatpush2.bf16.msra.mxu0 0
    %197 = vmatprep.subr.bf16.mxu0 0
    %198 = vmatpush2.bf16.msra.mxu0 0
    %199 = vmatprep.subr.bf16.mxu0 0
    %200 = vmatpush2.bf16.msra.mxu0 0
    %201 = vmatprep.subr.bf16.mxu0 0
    %202 = vmatpush2.bf16.msra.mxu0 0
    %203 = vmatprep.mubr.bf16.mxu0 0
    %204 = vmatmul.mubr.bf16.gmra.mxu0 %v121
    %v205 = vpop.f32.mrf.mxu0
    %v206 = vadd.f32 0.0, %v205
    %v207 = vpop.f32.mrf.mxu0
    %v208 = vpop.f32.mrf.mxu0
    %v209 = vadd.f32 0.0, %v208
    %v210 = vpop.f32.mrf.mxu0
    %211 = vdwg.mxu0
    %v214 = vunpack.c.l.b16 %v81
    %v215 = vunpack.c.l.b16 %v82
    %v216 = vpack.c.b16 %v215, %v214
    %v234 = vunpack.c.l.b16 %v83
    %v235 = vunpack.c.l.b16 %v84
    %v236 = vunpack.c.l.b16 %v85
    %v237 = vunpack.c.l.b16 %v86
    %v238 = vunpack.c.l.b16 %v87
    %v239 = vunpack.c.l.b16 %v88
    %v240 = vunpack.c.l.b16 %v89
    %v241 = vunpack.c.l.b16 %v90
    %v242 = vunpack.c.l.b16 %v91
    %v243 = vunpack.c.l.b16 %v92
    %v244 = vunpack.c.l.b16 %v93
    %v245 = vunpack.c.l.b16 %v94
    %v246 = vunpack.c.l.b16 %v95
    %v247 = vunpack.c.l.b16 %v96
    %v248 = vunpack.c.l.b16 %v97
    %v249 = vunpack.c.l.b16 %v98
    %v250 = vpack.c.b16 %v235, %v234
    %v251 = vpack.c.b16 %v237, %v236
    %v252 = vpack.c.b16 %v239, %v238
    %v253 = vpack.c.b16 %v241, %v240
    %v254 = vpack.c.b16 %v243, %v242
    %v255 = vpack.c.b16 %v245, %v244
    %v256 = vpack.c.b16 %v247, %v246
    %v257 = vpack.c.b16 %v249, %v248
    %266 = vmatprep.subr.bf16.mxu0 0
    %267 = vmatpush1.bf16.msra.mxu0 %v257
    %268 = vmatprep.subr.bf16.mxu0 0
    %269 = vmatpush1.bf16.msra.mxu0 %v256
    %270 = vmatprep.subr.bf16.mxu0 0
    %271 = vmatpush1.bf16.msra.mxu0 %v255
    %272 = vmatprep.subr.bf16.mxu0 0
    %273 = vmatpush1.bf16.msra.mxu0 %v254
    %274 = vmatprep.subr.bf16.mxu0 0
    %275 = vmatpush1.bf16.msra.mxu0 %v253
    %276 = vmatprep.subr.bf16.mxu0 0
    %277 = vmatpush1.bf16.msra.mxu0 %v252
    %278 = vmatprep.subr.bf16.mxu0 0
    %279 = vmatpush1.bf16.msra.mxu0 %v251
    %280 = vmatprep.subr.bf16.mxu0 0
    %281 = vmatpush1.bf16.msra.mxu0 %v250
    %282 = vmatprep.subr.bf16.mxu0 0
    %283 = vmatpush2.bf16.msra.mxu0 0
    %284 = vmatprep.subr.bf16.mxu0 0
    %285 = vmatpush2.bf16.msra.mxu0 0
    %286 = vmatprep.subr.bf16.mxu0 0
    %287 = vmatpush2.bf16.msra.mxu0 0
    %288 = vmatprep.subr.bf16.mxu0 0
    %289 = vmatpush2.bf16.msra.mxu0 0
    %290 = vmatprep.subr.bf16.mxu0 0
    %291 = vmatpush2.bf16.msra.mxu0 0
    %292 = vmatprep.subr.bf16.mxu0 0
    %293 = vmatpush2.bf16.msra.mxu0 0
    %294 = vmatprep.subr.bf16.mxu0 0
    %295 = vmatpush2.bf16.msra.mxu0 0
    %296 = vmatprep.subr.bf16.mxu0 0
    %297 = vmatpush2.bf16.msra.mxu0 0
    %298 = vmatprep.mubr.bf16.mxu0 0
    %299 = vmatmul.mubr.bf16.gmra.mxu0 %v216
    %v300 = vpop.f32.mrf.mxu0
    %v301 = vadd.f32 %v206, %v300
    %v302 = vpop.f32.mrf.mxu0
    %v303 = vpop.f32.mrf.mxu0
    %v304 = vadd.f32 %v209, %v303
    %v305 = vpop.f32.mrf.mxu0
    %306 = vdwg.mxu0
    %v307 = vld [vmem:[%s5] sm:$0x1]
    %v309 = vlaneseq
    %v310 = vshrl.u32 %v309, 7
    %v311 = vsub.s32 0, %v310
    %v312 = vrot.slane %v307, %v311
    %v314 = vadd.f32 %v301, %v312
    %v315 = vadd.f32 %v304, %v312
    %s316 = sld [smem:[#allocation2]]
    %v317 = vstv %s316
    %v318 = vmul.f32 %v314, %v317
    %v319 = vmul.f32 %v315, %v317
    %v320 = vtanh.pop %v318
    %v321 = vtanh.pop %v319
    %v322 = vtanh.pop %v320
    %v323 = vtanh.pop %v321
    %324 = vst [vmem:[#allocation11] sm:$0xff] %v322
    %325 = vst [vmem:[#allocation11 + $0x8] sm:$0xff] %v323
    // Predicated region
    $region42: #{tpu_custom_call.1} parent=1 // pred_check
      _
    $region43: #{tpu_custom_call.1} parent=1 // pred_check_branch
      %327 = sbr.rel (0) target = $region45
    $region44: #{tpu_custom_call.1} parent=1 // pred_region
      %s329 = ssub.s32 256, 256
      %330 = vsyncadd [#allocation5], %s329
      %s331 = sshll.u32 [#allocation11], 4
      %s332 = int_to_ptr.vmem [resolvable:$true] %s331
      %337 = dma.vmem_to_hbm [thread:$0]  %s332, 256, %s6, [#allocation5], 128, 128, 8
    $region45: #{tpu_custom_call.1} parent=1 // pred_fallthru
      _
    // Predicated region
    $region46: #{tpu_custom_call.1} parent=1 // pred_check
      _
    $region47: #{tpu_custom_call.1} parent=1 // pred_check_branch
      %339 = sbr.rel (0) target = $region49
    $region48: #{tpu_custom_call.1} parent=1 // pred_region
      %340 = dma.done [#allocation5], 256
    $region49: #{tpu_custom_call.1} parent=1 // pred_fallthru
      _
    %341 = vsyncpa [#allocation4], 1
    %342 = vsyncpa [#allocation7], 1
    %343 = vsyncpa [#allocation10], 1
    %344 = vsyncpa [#allocation5], 1

</llo_original>
